<compile_context>
chip_gen: v6e
topology: v6e:2x2x1
jax: 0.10.0
libtpu: 0.0.40
codegen_flags: <defaults>
</compile_context>

<pallas_src>
import jax
import jax.numpy as jnp
from jax.experimental import pallas as pl
from jax.experimental.pallas import tpu as pltpu

_NEG_BIG = -1e30   # Python float "-inf" stand-in (wrapper only; never captured)


def _round_up(a, b):
    return (a + b - 1) // b * b


def _vmem_capacity_bytes():
    try:
        return int(pltpu.get_tpu_info().vmem_capacity_bytes)
    except Exception:
        return 64 * 1024 * 1024     # conservative fallback (v7x per-core VMEM)


def _constrain_loss_kernel(xo_ref, xt_ref, xw_ref, rowc_ref, o_ref,
                           m_scr, l_scr):
    j = pl.program_id(1)

    # One MXU matmul per step: the obs operand carries both the scaled
    # features (2*inv * x_obs) and the bias column (log w - inv*||xo||^2),
    # picked up by the all-ones row of the x operand.
    #   s[jo, i] = 2*inv*<xo_jo, x_i> + logw'_jo        shape (TM, TN)
    s = jnp.dot(xo_ref[...], xt_ref[...], preferred_element_type=jnp.float32)

    blk_max = jnp.max(s, axis=0, keepdims=True)          # (1, TN) lane-dense

    @pl.when(j == 0)
    def _():
        # First obs tile: initialize running stats directly (no rescale).
        m_scr[...] = blk_max
        l_scr[...] = jnp.sum(jnp.exp(s - blk_max), axis=0, keepdims=True)

    @pl.when(j > 0)
    def _():
        m_prev = m_scr[...]
        m_new = jnp.maximum(m_prev, blk_max)
        l_scr[...] = (jnp.exp(m_prev - m_new) * l_scr[...]
                      + jnp.sum(jnp.exp(s - m_new), axis=0, keepdims=True))
        m_scr[...] = m_new

    @pl.when(j == pl.num_programs(1) - 1)
    def _():
        # Re-apply the hoisted row-constant -inv*||x_i||^2 (commutes with the
        # logsumexp over obs) and weight by x_w -> per-row partial loss.
        lse = m_scr[...] + jnp.log(l_scr[...]) + rowc_ref[...]
        o_ref[...] = -(xw_ref[...] * lse)


def constrain_loss(x, x_w, x_obs, x_obs_w, sigma, scale_factor, *,
                   tile_n=256, tile_m=512):
    """x: (N, d), x_w: (N,), x_obs: (M, d), x_obs_w: (M,) -> scalar loss."""
    f32 = jnp.float32
    x = x.astype(f32)
    x_w = x_w.astype(f32)
    x_obs = x_obs.astype(f32)
    x_obs_w = x_obs_w.astype(f32)

    N, d = x.shape
    M, d2 = x_obs.shape
    assert d == d2

    # Works with Python floats (constant-folded) or traced scalars (runtime,
    # no recompile) for sigma / scale_factor.
    inv = 1.0 / (2.0 * (scale_factor * sigma) ** 2)

    dc = _round_up(d + 1, 8)        # contraction dim: d features + 1 bias row

    # ---- Tile sizing -------------------------------------------------------
    # Obs axis lives on sublanes (multiple of 8).
    tile_m = max(8, min(_round_up(tile_m, 8), _round_up(M, 8)))
    # Row (x) axis lives on lanes (multiple of 128); aim for >=4 row tiles so
    # the "parallel" i-axis keeps both v7x TensorCores busy.
    tile_n_target = max(128, _round_up(-(-N // 4), 128))
    tile_n = max(128, min(_round_up(tile_n, 128), tile_n_target))

    vmem_cap = _vmem_capacity_bytes()
    budget = int(0.55 * vmem_cap)

    def fits(tn, tm):
        obs = 2 * tm * dc * 4        # double-buffered obs operand tiles
        xt = 2 * dc * tn * 4         # double-buffered x operand tiles
        sblk = 3 * tm * tn * 4       # s / exp intermediates (+ headroom)
        misc = 16 * tn * 4           # xw, rowc, out blocks, m/l scratch
        return obs + xt + sblk + misc <= budget

    while tile_m > 8 and not fits(tile_n, tile_m):
        tile_m = max(8, _round_up(tile_m // 2, 8))
    while tile_n > 128 and not fits(tile_n, tile_m):
        tile_n = max(128, (tile_n // 2) // 128 * 128)

    n_pad = _round_up(N, tile_n)
    m_pad = _round_up(M, tile_m)

    # ---- Operand packing (all grid-invariant work hoisted here) ------------
    # Obs operand A (m_pad, dc): cols [0:d] = 2*inv*x_obs, col d = logw' =
    # log(w) - inv*||xo||^2; padded obs rows get a -1e30 bias so their
    # exp() underflows to exactly 0 in the logsumexp.
    logw = jnp.log(x_obs_w) - inv * jnp.sum(x_obs * x_obs, axis=-1)
    xo_p = jnp.zeros((m_pad, dc), f32)
    xo_p = xo_p.at[:M, :d].set((2.0 * inv) * x_obs)
    xo_p = xo_p.at[:, d].set(_NEG_BIG)
    xo_p = xo_p.at[:M, d].set(logw)

    # x operand B (dc, n_pad): rows [0:d] = x^T, row d = 1 (bias pick-up),
    # remaining pad rows zero.  Padded x columns are zero with x_w == 0.
    xt_p = jnp.zeros((dc, n_pad), f32)
    xt_p = xt_p.at[:d, :N].set(x.T)
    xt_p = xt_p.at[d, :].set(1.0)

    xw_p = jnp.zeros((1, n_pad), f32).at[0, :N].set(x_w)
    rowc_p = jnp.zeros((1, n_pad), f32).at[0, :N].set(
        -inv * jnp.sum(x * x, axis=-1))

    grid = (n_pad // tile_n, m_pad // tile_m)

    partials = pl.pallas_call(
        _constrain_loss_kernel,
        out_shape=jax.ShapeDtypeStruct((1, n_pad), f32),
        grid_spec=pltpu.PrefetchScalarGridSpec(
            num_scalar_prefetch=0,
            grid=grid,
            in_specs=[
                pl.BlockSpec((tile_m, dc), lambda i, j: (j, 0)),   # obs tile
                pl.BlockSpec((dc, tile_n), lambda i, j: (0, i)),   # x^T tile
                pl.BlockSpec((1, tile_n), lambda i, j: (0, i)),    # x_w row
                pl.BlockSpec((1, tile_n), lambda i, j: (0, i)),    # -inv*||x||^2
            ],
            out_specs=pl.BlockSpec((1, tile_n), lambda i, j: (0, i)),
            scratch_shapes=[pltpu.VMEM((1, tile_n), f32),   # running max m
                            pltpu.VMEM((1, tile_n), f32)],  # running sum l
        ),
        compiler_params=pltpu.CompilerParams(
            dimension_semantics=("parallel", "arbitrary"),
            vmem_limit_bytes=min(int(0.85 * vmem_cap), 96 * 1024 * 1024)),
    )(xo_p, xt_p, xw_p, rowc_p)

    # Padded rows have x_w == 0 and contribute exactly 0.
    return jnp.sum(partials)


def constrain_loss_ref(x, x_w, x_obs, x_obs_w, sigma, scale_factor):
    diff = x[:, None, :] - x_obs[None, :, :]
    d2 = jnp.sum(diff * diff, axis=-1)
    C = -d2 / (2.0 * (scale_factor * sigma) ** 2) + jnp.log(x_obs_w)[None, :]
    return -jnp.dot(jax.nn.logsumexp(C, axis=1), x_w)


if __name__ == "__main__":
    key = jax.random.PRNGKey(0)
    k1, k2, k3, k4, k5 = jax.random.split(key, 5)

    d = 4          # feature dimension
    M = 12         # number of observed points (exercises obs-axis padding)
    sigma = 0.5
    scale_factor = 2.0

    # The PyTorch __init__ concatenates a list of tensors along dim 0.
    x_list = [jax.random.normal(k1, (7, d), dtype=jnp.float32),
              jax.random.normal(k2, (6, d), dtype=jnp.float32)]
    x = jnp.concatenate(x_list, axis=0)                       # (13, d) -> row padding
    N = x.shape[0]

    x_w = jax.nn.softmax(jax.random.normal(k3, (N,), dtype=jnp.float32))
    x_obs = jax.random.normal(k4, (M, d), dtype=jnp.float32)
    x_obs_w = jax.nn.softmax(jax.random.normal(k5, (M,), dtype=jnp.float32))

    loss = constrain_loss(x, x_w, x_obs, x_obs_w, sigma, scale_factor)
    loss = jax.block_until_ready(loss)

    ref = constrain_loss_ref(x, x_w, x_obs, x_obs_w, sigma, scale_factor)
    assert jnp.allclose(loss, ref, rtol=1e-4, atol=1e-5), (loss, ref)

    print("KERNEL_OK")
</pallas_src>

<mosaic_0001>
module attributes {stable_mosaic.version = 11 : i64} {
  func.func @_constrain_loss_kernel(%arg0: i32, %arg1: i32, %arg2: memref<16x8xf32, #tpu.memory_space<vmem>>, %arg3: memref<8x128xf32, #tpu.memory_space<vmem>>, %arg4: memref<1x128xf32, #tpu.memory_space<vmem>>, %arg5: memref<1x128xf32, #tpu.memory_space<vmem>>, %arg6: memref<1x128xf32, #tpu.memory_space<vmem>>, %arg7: memref<1x128xf32, #tpu.memory_space<vmem>>, %arg8: memref<1x128xf32, #tpu.memory_space<vmem>>) attributes {dimension_semantics = [#tpu.dimension_semantics<parallel>, #tpu.dimension_semantics<arbitrary>], iteration_bounds = array<i64: 1, 1>, scalar_prefetch = 0 : i64, scratch_operands = 2 : i64, tpu.core_type = #tpu.core_type<tc>, window_params = [{transform_indices = @transform_0, window_bounds = array<i64: 16, 8>}, {transform_indices = @transform_1, window_bounds = array<i64: 8, 128>}, {transform_indices = @transform_2, window_bounds = array<i64: 1, 128>}, {transform_indices = @transform_3, window_bounds = array<i64: 1, 128>}, {transform_indices = @transform_4, window_bounds = array<i64: 1, 128>}]} {
    %c0 = arith.constant 0 : index
    %c0_0 = arith.constant 0 : index
    %0 = vector.load %arg2[%c0, %c0_0] : memref<16x8xf32, #tpu.memory_space<vmem>>, vector<16x8xf32>
    %c0_1 = arith.constant 0 : index
    %c0_2 = arith.constant 0 : index
    %1 = vector.load %arg3[%c0_1, %c0_2] : memref<8x128xf32, #tpu.memory_space<vmem>>, vector<8x128xf32>
    %cst = arith.constant dense<0.000000e+00> : vector<16x128xf32>
    %2 = tpu.matmul %0, %1, %cst {dimension_numbers = #tpu.dot_dimension_numbers<[1], [0], [0], [1], [0, 0, 1, 1], [], []>} : vector<16x8xf32>, vector<8x128xf32>, vector<16x128xf32> -> vector<16x128xf32>
    %cst_3 = arith.constant dense<0xFF800000> : vector<128xf32>
    %3 = vector.multi_reduction <maximumf>, %2, %cst_3 [0] : vector<16x128xf32> to vector<128xf32>
    %4 = vector.shape_cast %3 : vector<128xf32> to vector<1x128xf32>
    %c0_i32 = arith.constant 0 : i32
    %5 = arith.cmpi eq, %arg1, %c0_i32 : i32
    %6 = arith.extui %5 : i1 to i32
    %c0_i32_4 = arith.constant 0 : i32
    %7 = arith.cmpi ne, %6, %c0_i32_4 : i32
    scf.if %7 {
      %c0_9 = arith.constant 0 : index
      %c0_10 = arith.constant 0 : index
      %14 = vector.load %arg7[%c0_9, %c0_10] : memref<1x128xf32, #tpu.memory_space<vmem>>, vector<1x128xf32>
      tpu.vector_store %arg7[%c0_9, %c0_10], %4 {strides = array<i32>} : memref<1x128xf32, #tpu.memory_space<vmem>>, vector<1x128xf32>,
      %15 = vector.broadcast %4 : vector<1x128xf32> to vector<16x128xf32>
      %16 = arith.subf %2, %15 : vector<16x128xf32>
      %17 = math.exp %16 : vector<16x128xf32>
      %cst_11 = arith.constant dense<0.000000e+00> : vector<128xf32>
      %18 = vector.multi_reduction <add>, %17, %cst_11 [0] : vector<16x128xf32> to vector<128xf32>
      %19 = vector.shape_cast %18 : vector<128xf32> to vector<1x128xf32>
      %c0_12 = arith.constant 0 : index
      %c0_13 = arith.constant 0 : index
      %20 = vector.load %arg8[%c0_12, %c0_13] : memref<1x128xf32, #tpu.memory_space<vmem>>, vector<1x128xf32>
      tpu.vector_store %arg8[%c0_12, %c0_13], %19 {strides = array<i32>} : memref<1x128xf32, #tpu.memory_space<vmem>>, vector<1x128xf32>,
    } else {
    }
    %c0_i32_5 = arith.constant 0 : i32
    %8 = arith.cmpi sgt, %arg1, %c0_i32_5 : i32
    %9 = arith.extui %8 : i1 to i32
    %c0_i32_6 = arith.constant 0 : i32
    %10 = arith.cmpi ne, %9, %c0_i32_6 : i32
    scf.if %10 {
      %c0_9 = arith.constant 0 : index
      %c0_10 = arith.constant 0 : index
      %14 = vector.load %arg7[%c0_9, %c0_10] : memref<1x128xf32, #tpu.memory_space<vmem>>, vector<1x128xf32>
      %15 = arith.maximumf %14, %4 : vector<1x128xf32>
      %16 = arith.subf %14, %15 : vector<1x128xf32>
      %17 = math.exp %16 : vector<1x128xf32>
      %c0_11 = arith.constant 0 : index
      %c0_12 = arith.constant 0 : index
      %18 = vector.load %arg8[%c0_11, %c0_12] : memref<1x128xf32, #tpu.memory_space<vmem>>, vector<1x128xf32>
      %19 = arith.mulf %17, %18 : vector<1x128xf32>
      %20 = vector.broadcast %15 : vector<1x128xf32> to vector<16x128xf32>
      %21 = arith.subf %2, %20 : vector<16x128xf32>
      %22 = math.exp %21 : vector<16x128xf32>
      %cst_13 = arith.constant dense<0.000000e+00> : vector<128xf32>
      %23 = vector.multi_reduction <add>, %22, %cst_13 [0] : vector<16x128xf32> to vector<128xf32>
      %24 = vector.shape_cast %23 : vector<128xf32> to vector<1x128xf32>
      %25 = arith.addf %19, %24 : vector<1x128xf32>
      %c0_14 = arith.constant 0 : index
      %c0_15 = arith.constant 0 : index
      %26 = vector.load %arg8[%c0_14, %c0_15] : memref<1x128xf32, #tpu.memory_space<vmem>>, vector<1x128xf32>
      tpu.vector_store %arg8[%c0_14, %c0_15], %25 {strides = array<i32>} : memref<1x128xf32, #tpu.memory_space<vmem>>, vector<1x128xf32>,
      %c0_16 = arith.constant 0 : index
      %c0_17 = arith.constant 0 : index
      %27 = vector.load %arg7[%c0_16, %c0_17] : memref<1x128xf32, #tpu.memory_space<vmem>>, vector<1x128xf32>
      tpu.vector_store %arg7[%c0_16, %c0_17], %15 {strides = array<i32>} : memref<1x128xf32, #tpu.memory_space<vmem>>, vector<1x128xf32>,
    } else {
    }
    %c0_i32_7 = arith.constant 0 : i32
    %11 = arith.cmpi eq, %arg1, %c0_i32_7 : i32
    %12 = arith.extui %11 : i1 to i32
    %c0_i32_8 = arith.constant 0 : i32
    %13 = arith.cmpi ne, %12, %c0_i32_8 : i32
    scf.if %13 {
      %c0_9 = arith.constant 0 : index
      %c0_10 = arith.constant 0 : index
      %14 = vector.load %arg7[%c0_9, %c0_10] : memref<1x128xf32, #tpu.memory_space<vmem>>, vector<1x128xf32>
      %c0_11 = arith.constant 0 : index
      %c0_12 = arith.constant 0 : index
      %15 = vector.load %arg8[%c0_11, %c0_12] : memref<1x128xf32, #tpu.memory_space<vmem>>, vector<1x128xf32>
      %16 = math.log %15 : vector<1x128xf32>
      %17 = arith.addf %14, %16 : vector<1x128xf32>
      %c0_13 = arith.constant 0 : index
      %c0_14 = arith.constant 0 : index
      %18 = vector.load %arg5[%c0_13, %c0_14] : memref<1x128xf32, #tpu.memory_space<vmem>>, vector<1x128xf32>
      %19 = arith.addf %17, %18 : vector<1x128xf32>
      %c0_15 = arith.constant 0 : index
      %c0_16 = arith.constant 0 : index
      %20 = vector.load %arg4[%c0_15, %c0_16] : memref<1x128xf32, #tpu.memory_space<vmem>>, vector<1x128xf32>
      %21 = arith.mulf %20, %19 : vector<1x128xf32>
      %cst_17 = arith.constant 0.000000e+00 : f32
      %22 = vector.broadcast %cst_17 : f32 to vector<1x128xf32>
      %23 = arith.subf %22, %21 : vector<1x128xf32>
      %c0_18 = arith.constant 0 : index
      %c0_19 = arith.constant 0 : index
      %24 = vector.load %arg6[%c0_18, %c0_19] : memref<1x128xf32, #tpu.memory_space<vmem>>, vector<1x128xf32>
      tpu.vector_store %arg6[%c0_18, %c0_19], %23 {strides = array<i32>} : memref<1x128xf32, #tpu.memory_space<vmem>>, vector<1x128xf32>,
    } else {
    }
    return
  }
  func.func @transform_0(%arg0: i32, %arg1: i32) -> (i32, i32) {
    %c0_i32 = arith.constant 0 : i32
    %c0_i32_0 = arith.constant 0 : i32
    return %arg1, %c0_i32 : i32, i32
  }
  func.func @transform_1(%arg0: i32, %arg1: i32) -> (i32, i32) {
    %c0_i32 = arith.constant 0 : i32
    %c0_i32_0 = arith.constant 0 : i32
    return %c0_i32, %arg0 : i32, i32
  }
  func.func @transform_2(%arg0: i32, %arg1: i32) -> (i32, i32) {
    %c0_i32 = arith.constant 0 : i32
    %c0_i32_0 = arith.constant 0 : i32
    return %c0_i32, %arg0 : i32, i32
  }
  func.func @transform_3(%arg0: i32, %arg1: i32) -> (i32, i32) {
    %c0_i32 = arith.constant 0 : i32
    %c0_i32_0 = arith.constant 0 : i32
    return %c0_i32, %arg0 : i32, i32
  }
  func.func @transform_4(%arg0: i32, %arg1: i32) -> (i32, i32) {
    %c0_i32 = arith.constant 0 : i32
    %c0_i32_0 = arith.constant 0 : i32
    return %c0_i32, %arg0 : i32, i32
  }
}

</mosaic_0001>

<llo_original>
// kernel: tpu_custom_call.1
$region0: #{tpu_custom_call.1}
  #allocation0 [shape = 'u32[]', space=smem, size = 0x4, offset = 0x4, fixed_abs, tag = 'smem constant byte address 0x4 - core index']
  #allocation1 [shape = 'u32[144,128]{1,0:T(1,128)}', space=vmem, size = 0x12000, scoped, tag = 'internal scratch']
  #allocation2 [shape = 'f32[1,128]{1,0:T(1,128)}', space=vmem, size = 0x200, scoped, tag = 'scratch operand']
  #allocation3 [shape = 'f32[1,128]{1,0:T(1,128)}', space=vmem, size = 0x200, scoped, tag = 'scratch operand']
  %s0 = inlined_call_operand.vmem [shape: f32[16,8], index: 0, kind: input, shape index: {}]
  %s1 = inlined_call_operand.vmem [shape: f32[8,128], index: 1, kind: input, shape index: {}]
  %s2 = inlined_call_operand.vmem [shape: f32[1,128], index: 2, kind: input, shape index: {}]
  %s3 = inlined_call_operand.vmem [shape: f32[1,128], index: 3, kind: input, shape index: {}]
  %s4 = inlined_call_operand.hbm [shape: f32[1,128], index: 4, kind: output, shape index: {}]
  %s5 = sld [smem:[#allocation0]]
  $region38: #{tpu_custom_call.1} parent=0
    _
  %s7 = ssub.s32 1, %s5
  %s8 = scalar_select 0, %s7, %s5
  $region1: #{tpu_custom_call.1} parent=0
    #allocation4 [shape = 'u8[512]{0}', space=vmem, size = 0x400, scoped, tag = 'output window, operand 0, single buffered']
    #allocation5 [shape = 's32[1]{0}', space=sflag, size = 0x4, scoped, tag = 'scoped memory for tpu_custom_call.1']
    %9 = vsyncpa [#allocation5], 0
    // Predicated region
    $region2: #{tpu_custom_call.1} parent=1 // pred_check
      _
    $region3: #{tpu_custom_call.1} parent=1 // pred_check_branch
      %11 = sbr.rel (0) target = $region5
    $region4: #{tpu_custom_call.1} parent=1 // pred_region
      _
    $region5: #{tpu_custom_call.1} parent=1 // pred_fallthru
      _
    // Predicated region
    $region6: #{tpu_custom_call.1} parent=1 // pred_check
      _
    $region7: #{tpu_custom_call.1} parent=1 // pred_check_branch
      %13 = sbr.rel (0) target = $region9
    $region8: #{tpu_custom_call.1} parent=1 // pred_region
      _
    $region9: #{tpu_custom_call.1} parent=1 // pred_fallthru
      _
    // Predicated region
    $region10: #{tpu_custom_call.1} parent=1 // pred_check
      _
    $region11: #{tpu_custom_call.1} parent=1 // pred_check_branch
      %15 = sbr.rel (0) target = $region13
    $region12: #{tpu_custom_call.1} parent=1 // pred_region
      _
    $region13: #{tpu_custom_call.1} parent=1 // pred_fallthru
      _
    // Predicated region
    $region14: #{tpu_custom_call.1} parent=1 // pred_check
      _
    $region15: #{tpu_custom_call.1} parent=1 // pred_check_branch
      %17 = sbr.rel (0) target = $region17
    $region16: #{tpu_custom_call.1} parent=1 // pred_region
      _
    $region17: #{tpu_custom_call.1} parent=1 // pred_fallthru
      _
    %v18 = vld [vmem:[%s0] sm:$0xff]
    %v19 = vld [vmem:[%s0 + $0x8] sm:$0xff]
    %v20 = vld [vmem:[%s1] sm:$0xff]
    %vm21 = vcmask 64512
    %v23 = vsel %vm21, %v18, 0
    %v26 = vsel %vm21, %v19, 0
    %28 = vmatprep.subr.mxu0 0.0
    %29 = vmatpush1.msra.mxu0 0.0
    %30 = vmatprep.subr.mxu0 0.0
    %31 = vmatpush1.msra.mxu0 0.0
    %32 = vmatprep.subr.mxu0 0.0
    %33 = vmatpush1.msra.mxu0 0.0
    %34 = vmatprep.subr.mxu0 0.0
    %35 = vmatpush1.msra.mxu0 0.0
    %36 = vmatprep.subr.mxu0 0.0
    %37 = vmatpush1.msra.mxu0 0.0
    %38 = vmatprep.subr.mxu0 0.0
    %39 = vmatpush1.msra.mxu0 0.0
    %40 = vmatprep.subr.mxu0 0.0
    %41 = vmatpush1.msra.mxu0 0.0
    %42 = vmatprep.subr.mxu0 0.0
    %43 = vmatpush1.msra.mxu0 0.0
    %44 = vmatprep.subr.mxu0 0.0
    %45 = vmatpush1.msra.mxu0 0.0
    %46 = vmatprep.subr.mxu0 0.0
    %47 = vmatpush1.msra.mxu0 0.0
    %48 = vmatprep.subr.mxu0 0.0
    %49 = vmatpush1.msra.mxu0 0.0
    %50 = vmatprep.subr.mxu0 0.0
    %51 = vmatpush1.msra.mxu0 0.0
    %52 = vmatprep.subr.mxu0 0.0
    %53 = vmatpush1.msra.mxu0 0.0
    %54 = vmatprep.subr.mxu0 0.0
    %55 = vmatpush1.msra.mxu0 0.0
    %56 = vmatprep.subr.mxu0 0.0
    %57 = vmatpush1.msra.mxu0 0.0
    %58 = vmatprep.subr.mxu0 0.0
    %59 = vmatpush1.msra.mxu0 %v20
    %60 = vmatprep.subr.mxu0 0.0
    %61 = vmatpush2.msra.mxu0 0.0
    %62 = vmatprep.subr.mxu0 0.0
    %63 = vmatpush2.msra.mxu0 0.0
    %64 = vmatprep.subr.mxu0 0.0
    %65 = vmatpush2.msra.mxu0 0.0
    %66 = vmatprep.subr.mxu0 0.0
    %67 = vmatpush2.msra.mxu0 0.0
    %68 = vmatprep.subr.mxu0 0.0
    %69 = vmatpush2.msra.mxu0 0.0
    %70 = vmatprep.subr.mxu0 0.0
    %71 = vmatpush2.msra.mxu0 0.0
    %72 = vmatprep.subr.mxu0 0.0
    %73 = vmatpush2.msra.mxu0 0.0
    %74 = vmatprep.subr.mxu0 0.0
    %75 = vmatpush2.msra.mxu0 0.0
    %76 = vmatprep.subr.mxu0 0.0
    %77 = vmatpush2.msra.mxu0 0.0
    %78 = vmatprep.subr.mxu0 0.0
    %79 = vmatpush2.msra.mxu0 0.0
    %80 = vmatprep.subr.mxu0 0.0
    %81 = vmatpush2.msra.mxu0 0.0
    %82 = vmatprep.subr.mxu0 0.0
    %83 = vmatpush2.msra.mxu0 0.0
    %84 = vmatprep.subr.mxu0 0.0
    %85 = vmatpush2.msra.mxu0 0.0
    %86 = vmatprep.subr.mxu0 0.0
    %87 = vmatpush2.msra.mxu0 0.0
    %88 = vmatprep.subr.mxu0 0.0
    %89 = vmatpush2.msra.mxu0 0.0
    %90 = vmatprep.subr.mxu0 0.0
    %91 = vmatpush2.msra.mxu0 0.0
    %92 = vmatprep.mubr.f32.mxu0 0.0
    %93 = vmatmul.mubr.f32.gmra.mxu0 %v23
    %v94 = vpop.f32.mrf.mxu0
    %v95 = vadd.f32 0.0, %v94
    %v96 = vpop.f32.mrf.mxu0
    %97 = vmatprep.mubr.f32.mxu0 0.0
    %98 = vmatmul.mubr.f32.gmra.mxu0 %v26
    %v99 = vpop.f32.mrf.mxu0
    %v100 = vadd.f32 0.0, %v99
    %v101 = vpop.f32.mrf.mxu0
    %102 = vdwg.mxu0
    %v103 = vmax.f32 %v95, %v100
    %v104 = vrot.slane %v103, 4
    %v105 = vmax.f32 %v103, %v104
    %v106 = vrot.slane %v105, 2
    %v107 = vmax.f32 %v105, %v106
    %v108 = vrot.slane %v107, 1
    %v109 = vmax.f32 %v107, %v108
    %p110 = scmp.eq.s32.totalorder 0, 0
    // Predicated region
    $region18: #{tpu_custom_call.1} parent=1 // pred_check
      %p111 = pneg %p110
    $region19: #{tpu_custom_call.1} parent=1 // pred_check_branch
      %113 = sbr.rel (%p111) target = $region21
    $region20: #{tpu_custom_call.1} parent=1 // pred_region
      %114 = vst [vmem:[#allocation2] sm:$0x1] %v109
      %v115 = vsub.f32 %v95, %v109
      %v116 = vsub.f32 %v100, %v109
      %v117 = vmul.f32 %v115, 1.442695
      %v118 = vpow.pop %v117
      %v119 = vmul.f32 %v116, 1.442695
      %v120 = vpow.pop %v119
      %v121 = vadd.f32 %v118, %v120
      %v122 = vrot.slane %v121, 4
      %v123 = vadd.f32 %v121, %v122
      %v124 = vrot.slane %v123, 2
      %v125 = vadd.f32 %v123, %v124
      %v126 = vrot.slane %v125, 1
      %v127 = vadd.f32 %v125, %v126
      %128 = vst [vmem:[#allocation3] sm:$0x1] %v127
    $region21: #{tpu_custom_call.1} parent=1 // pred_fallthru
      _
    %p129 = scmp.gt.s32.totalorder 0, 0
    // Predicated region
    $region22: #{tpu_custom_call.1} parent=1 // pred_check
      %p130 = pneg %p129
    $region23: #{tpu_custom_call.1} parent=1 // pred_check_branch
      %132 = sbr.rel (%p130) target = $region25
    $region24: #{tpu_custom_call.1} parent=1 // pred_region
      %v133 = vld [vmem:[#allocation2] sm:$0x1]
      %v134 = vmax.f32 %v133, %v109
      %v135 = vsub.f32 %v133, %v134
      %v136 = vmul.f32 %v135, 1.442695
      %v137 = vpow.pop %v136
      %v138 = vld [vmem:[#allocation3] sm:$0x1]
      %v139 = vmul.f32 %v137, %v138
      %v141 = vlaneseq
      %v142 = vshrl.u32 %v141, 7
      %v143 = vsub.s32 0, %v142
      %v144 = vrot.slane %v134, %v143
      %v146 = vsub.f32 %v95, %v144
      %v147 = vsub.f32 %v100, %v144
      %v148 = vmul.f32 %v146, 1.442695
      %v149 = vpow.pop %v148
      %v150 = vmul.f32 %v147, 1.442695
      %v151 = vpow.pop %v150
      %v152 = vadd.f32 %v149, %v151
      %v153 = vrot.slane %v152, 4
      %v154 = vadd.f32 %v152, %v153
      %v155 = vrot.slane %v154, 2
      %v156 = vadd.f32 %v154, %v155
      %v157 = vrot.slane %v156, 1
      %v158 = vadd.f32 %v156, %v157
      %v159 = vadd.f32 %v139, %v158
      %160 = vst [vmem:[#allocation3] sm:$0x1] %v159
      %161 = vst [vmem:[#allocation2] sm:$0x1] %v134
    $region25: #{tpu_custom_call.1} parent=1 // pred_fallthru
      _
    // Predicated region
    $region26: #{tpu_custom_call.1} parent=1 // pred_check
      %p162 = pneg %p110
    $region27: #{tpu_custom_call.1} parent=1 // pred_check_branch
      %164 = sbr.rel (%p162) target = $region29
    $region28: #{tpu_custom_call.1} parent=1 // pred_region
      %v165 = vld [vmem:[#allocation2] sm:$0x1]
      %v166 = vld [vmem:[#allocation3] sm:$0x1]
      %v167 = vlog2.pop %v166
      %v168 = vmul.f32 %v167, 0.6931472
      %v169 = vadd.f32 %v165, %v168
      %v170 = vld [vmem:[%s3] sm:$0x1]
      %v171 = vadd.f32 %v169, %v170
      %v172 = vld [vmem:[%s2] sm:$0x1]
      %v173 = vmul.f32 %v172, %v171
      %v174 = vsub.f32 0.0, %v173
      %175 = vst [vmem:[#allocation4] sm:$0x1] %v174
    $region29: #{tpu_custom_call.1} parent=1 // pred_fallthru
      _
    // Predicated region
    $region30: #{tpu_custom_call.1} parent=1 // pred_check
      _
    $region31: #{tpu_custom_call.1} parent=1 // pred_check_branch
      %177 = sbr.rel (0) target = $region33
    $region32: #{tpu_custom_call.1} parent=1 // pred_region
      %s179 = ssub.s32 16, 16
      %180 = vsyncadd [#allocation5], %s179
      %s182 = sshll.u32 [#allocation4], 4
      %s183 = int_to_ptr.vmem [resolvable:$true] %s182
      %185 = dma.vmem_to_hbm [thread:$0]  %s183, 16, %s4, [#allocation5]
    $region33: #{tpu_custom_call.1} parent=1 // pred_fallthru
      _
    // Predicated region
    $region34: #{tpu_custom_call.1} parent=1 // pred_check
      _
    $region35: #{tpu_custom_call.1} parent=1 // pred_check_branch
      %187 = sbr.rel (0) target = $region37
    $region36: #{tpu_custom_call.1} parent=1 // pred_region
      %188 = dma.done [#allocation5], 16
    $region37: #{tpu_custom_call.1} parent=1 // pred_fallthru
      _
    %189 = vsyncpa [#allocation5], 1

</llo_original>
